<compile_context>
chip_gen: v5e
topology: v5e:2x2
jax: 0.10.0
libtpu: 0.0.40
codegen_flags: <defaults>
</compile_context>

<pallas_src>
import functools

import jax
import jax.numpy as jnp
from jax.experimental import pallas as pl
from jax.experimental.pallas import tpu as pltpu


# ---------------------------------------------------------------------------
# Kernel
# ---------------------------------------------------------------------------
def _pyramid_kernel(x_ref, a_ref, *out_refs):
    """Fused pyramid for one (batch, channel, row-tile) block.

    x_ref:          (R0, W)            level-0 tile
    out_refs[l-1]:  (R0 >> l, W >> l)  level-l tile, l = 1..L
    a_ref:          (W, W // 2) with A[2k, k] = A[2k+1, k] = 0.25; its
                    top-left (w, w//2) sub-block is the column-averaging
                    matrix for width w, so one matrix serves every level via
                    static (zero-cost) slicing.
    """
    src = x_ref
    for dst in out_refs:
        rows_out, w_out = dst.shape
        w_in = src.shape[1]
        a = a_ref[0:w_in, 0:w_out]                       # static sub-slice
        # Chunk over output rows (~512 KiB of f32 pair-rows per chunk):
        # bounds vreg/VMEM pressure and lets the VPU row-sum of chunk k+1
        # overlap the MXU matmul of chunk k.
        chunk = max(8, min(rows_out, ((1 << 19) // (w_in * 4)) // 8 * 8))
        r = 0
        while r < rows_out:                               # static trip count
            cr = min(chunk, rows_out - r)
            # Row pairing on the VPU: two sublane-strided loads + add (a
            # pair-SUM; A's 0.25 entries fold in both 1/2 factors).
            even = src[pl.ds(2 * r, cr, stride=2), :].astype(jnp.float32)
            odd = src[pl.ds(2 * r + 1, cr, stride=2), :].astype(jnp.float32)
            pair = even + odd                             # (cr, w_in)
            if a_ref.dtype != jnp.float32:                # approximate path
                pair = pair.astype(a_ref.dtype)
            # Column average as one small matmul on the MXU.
            # TODO(synk): on v5e a roll + lane-strided-read column average
            # would avoid the O(W^2) dense matmul entirely.
            dst[pl.ds(r, cr), :] = jnp.dot(
                pair, a, preferred_element_type=jnp.float32).astype(dst.dtype)
            r += cr
        # Next level reads this level's output block while it is still in VMEM.
        src = dst


# ---------------------------------------------------------------------------
# Tiling heuristics
# ---------------------------------------------------------------------------
_TILE_TARGET_BYTES = 2 << 20     # ~2 MiB per level-0 input tile (HBM-bound)
_MIN_GRID_STEPS = 16             # keep both v7x TensorCores fed
_MIN_KERNEL_LANES = 128          # keep kernel output widths lane-dense


def _vmem_budget_bytes() -> int:
    """Generation-aware scoped-VMEM budget (v5e/v6e: 128 MiB phys, v7x: 64)."""
    cap = None
    try:
        cap = getattr(pltpu.get_tpu_info(), "vmem_capacity_bytes", None)
    except Exception:  # best-effort hardware query
        cap = None
    if cap is None:
        return 48 << 20          # safe on every generation
    return (64 << 20) if cap >= (128 << 20) else (48 << 20)


def _round_down(x: int, m: int) -> int:
    return (x // m) * m


def _pick_row_tile(N, C, H, W, fused, itemsize, a_resident_bytes, vmem_budget):
    """Level-0 rows per grid step (always a multiple of 8 * 2**fused)."""
    unit = 8 << fused
    row_bytes = max(1, W * itemsize)
    # Per-step VMEM ~= 2*T (double-buffered input) + 2*T/3 (outputs) + A.
    cap_bytes = max(row_bytes * unit,
                    (vmem_budget - a_resident_bytes - (4 << 20)) * 3 // 8)
    target = min(_TILE_TARGET_BYTES, cap_bytes)
    t_rows = max(unit, _round_down(target // row_bytes, unit))

    h_units = -(-H // unit)                      # ceil(H / unit)
    t_rows = min(t_rows, h_units * unit)

    # Prefer the largest tile that divides the unit-aligned H (no extra
    # padding); if that is much smaller than the byte target and the image is
    # tall, accept padding H up to a multiple of the target tile instead.
    best = unit
    for d in range(1, h_units + 1):
        if h_units % d == 0 and d * unit <= t_rows:
            best = d * unit
    if best * 2 <= t_rows and H >= 4 * t_rows:
        best = t_rows

    # Keep enough grid steps for the megacore / 2-TC split.
    while N * C * (-(-H // best)) < _MIN_GRID_STEPS and best > unit:
        nxt = max(unit, _round_down(best // 2, unit))
        if nxt == best:
            break
        best = nxt
    return best


def _avg_pairs_matrix(w: int, dtype=jnp.float32) -> jnp.ndarray:
    """(w, w//2) matrix A with A[2k, k] = A[2k+1, k] = 0.25 (exact in f32/bf16)."""
    j = jnp.arange(w)[:, None]
    k = jnp.arange(w // 2)[None, :]
    a = ((j == 2 * k) | (j == 2 * k + 1)).astype(jnp.float32) * 0.25
    return a.astype(dtype)


# ---------------------------------------------------------------------------
# pallas_call wrapper
# ---------------------------------------------------------------------------
@functools.partial(jax.jit, static_argnames=("num_levels", "exact"))
def _pyramid_call(x: jnp.ndarray, num_levels: int, exact: bool = True):
    """Returns pyramid levels 1..num_levels from one fused pallas_call."""
    N, C, H, W = x.shape
    if H % (1 << num_levels) or W % (1 << num_levels):
        raise ValueError("H and W must be divisible by 2**num_levels")
    itemsize = jnp.dtype(x.dtype).itemsize

    a_dtype = jnp.float32 if exact else jnp.bfloat16     # 0.25 exact in both
    a_bytes = W * (W // 2) * jnp.dtype(a_dtype).itemsize
    # Single-buffer the constant averaging matrix once it is big enough to
    # matter; with a constant index_map it is DMA'd exactly once either way.
    a_single_buffer = a_bytes >= (1 << 19)
    a_resident = a_bytes * (1 if a_single_buffer else 2)

    vmem_budget = _vmem_budget_bytes()
    r0 = _pick_row_tile(N, C, H, W, num_levels, itemsize, a_resident,
                        vmem_budget)

    # Pad H so the row tile divides it exactly: 2x2 pooling is local, so the
    # padded rows only produce extra output rows that are sliced off below.
    grid_rows = -(-H // r0)
    H_pad = grid_rows * r0
    if H_pad != H:
        x = jnp.pad(x, ((0, 0), (0, 0), (0, H_pad - H), (0, 0)))

    a = _avg_pairs_matrix(W, a_dtype)

    out_shapes = tuple(
        jax.ShapeDtypeStruct((N, C, H_pad >> l, W >> l), x.dtype)
        for l in range(1, num_levels + 1))
    out_specs = tuple(
        pl.BlockSpec((None, None, r0 >> l, W >> l),
                     lambda n, c, r: (n, c, r, 0))
        for l in range(1, num_levels + 1))

    a_spec_kwargs = {}
    if a_single_buffer:
        a_spec_kwargs["pipeline_mode"] = pl.Buffered(1)
    in_specs = [
        pl.BlockSpec((None, None, r0, W), lambda n, c, r: (n, c, r, 0)),
        # Constant index map: DMA'd once, stays resident across grid steps.
        pl.BlockSpec((W, W // 2), lambda n, c, r: (0, 0), **a_spec_kwargs),
    ]

    outs = pl.pallas_call(
        _pyramid_kernel,
        out_shape=out_shapes,
        grid=(N, C, grid_rows),
        in_specs=in_specs,
        out_specs=out_specs,
        compiler_params=pltpu.CompilerParams(
            dimension_semantics=("parallel", "parallel", "parallel"),
            vmem_limit_bytes=vmem_budget),
    )(x, a)

    if H_pad != H:
        outs = tuple(o[:, :, : (H >> l), :]
                     for l, o in zip(range(1, num_levels + 1), outs))
    return tuple(outs)


def _downsample2x_xla(x: jnp.ndarray) -> jnp.ndarray:
    """Plain-XLA exact 2x2 mean (used for tiny tail levels and as reference)."""
    N, C, H, W = x.shape
    return x.reshape(N, C, H // 2, 2, W // 2, 2).mean(axis=(3, 5))


def feature_pyramid(x: jnp.ndarray, levels, exact: bool = True) -> list:
    """Equivalent of the 0.5x bilinear feature pyramid for an NCHW tensor."""
    levels = sorted(levels)
    num_down = levels[-1]
    N, C, H, W = x.shape
    if num_down > 0 and (H % (1 << num_down) or W % (1 << num_down)):
        raise ValueError("H and W must be divisible by 2**max(levels)")

    all_levels = [x]
    if num_down > 0:
        # Fuse levels inside the kernel while their width stays lane-dense
        # (>=128 lanes); the tiny tail levels (<2% of the data) run as cheap
        # plain-XLA ops on the last kernel output.
        fused = 1
        while fused < num_down and (W >> (fused + 1)) >= _MIN_KERNEL_LANES:
            fused += 1
        all_levels.extend(_pyramid_call(x, num_levels=fused, exact=exact))
        cur = all_levels[-1]
        for _ in range(fused + 1, num_down + 1):
            cur = _downsample2x_xla(cur)
            all_levels.append(cur)
    return [all_levels[l] for l in levels]


if __name__ == "__main__":
    key = jax.random.PRNGKey(0)
    # Small deterministic example consistent with the module's image features:
    # batch=2, channels=4, 16x16 spatial.
    x = jax.random.normal(key, (2, 4, 16, 16), dtype=jnp.float32)
    levels = [0, 1, 2]

    outs = feature_pyramid(x, levels)
    outs = [jax.block_until_ready(o) for o in outs]

    # Pure-JAX reference: bilinear 0.5x (align_corners=False) == 2x2 average.
    ref, r = [], x
    for level in range(levels[-1] + 1):
        if level in levels:
            ref.append(r)
        if level < levels[-1]:
            r = _downsample2x_xla(r)

    assert len(outs) == len(ref)
    for o, rr in zip(outs, ref):
        assert o.shape == rr.shape and o.dtype == rr.dtype
        assert jnp.allclose(o, rr, rtol=1e-5, atol=1e-5)

    print("KERNEL_OK")
</pallas_src>

<mosaic_0001>
module attributes {stable_mosaic.version = 11 : i64} {
  func.func @_pyramid_kernel(%arg0: i32, %arg1: i32, %arg2: i32, %arg3: memref<1x1x16x16xf32, #tpu.memory_space<vmem>>, %arg4: memref<16x8xf32, #tpu.memory_space<vmem>>, %arg5: memref<1x1x8x8xf32, #tpu.memory_space<vmem>>) attributes {dimension_semantics = [#tpu.dimension_semantics<parallel>, #tpu.dimension_semantics<parallel>, #tpu.dimension_semantics<parallel>], iteration_bounds = array<i64: 2, 4, 1>, scalar_prefetch = 0 : i64, scratch_operands = 0 : i64, tpu.core_type = #tpu.core_type<tc>, window_params = [{transform_indices = @transform_0, window_bounds = array<i64: 1, 1, 16, 16>}, {pipeline_mode = #tpu.pipeline_mode<synchronous>, transform_indices = @transform_1, window_bounds = array<i64: 16, 8>}, {transform_indices = @transform_2, window_bounds = array<i64: 1, 1, 8, 8>}]} {
    %c0 = arith.constant 0 : index
    %c0_0 = arith.constant 0 : index
    %0 = vector.load %arg4[%c0, %c0_0] : memref<16x8xf32, #tpu.memory_space<vmem>>, vector<16x8xf32>
    %c0_1 = arith.constant 0 : index
    %c0_2 = arith.constant 0 : index
    %c0_3 = arith.constant 0 : index
    %c0_4 = arith.constant 0 : index
    %1 = tpu.strided_load %arg3[%c0_1, %c0_2, %c0_3, %c0_4] {strides = array<i32: 1, 1, 2, 1>} : memref<1x1x16x16xf32, #tpu.memory_space<vmem>>, vector<1x1x8x16xf32>
    %2 = vector.shape_cast %1 : vector<1x1x8x16xf32> to vector<8x16xf32>
    %c0_5 = arith.constant 0 : index
    %c0_6 = arith.constant 0 : index
    %c1 = arith.constant 1 : index
    %c0_7 = arith.constant 0 : index
    %3 = tpu.strided_load %arg3[%c0_5, %c0_6, %c1, %c0_7] {strides = array<i32: 1, 1, 2, 1>} : memref<1x1x16x16xf32, #tpu.memory_space<vmem>>, vector<1x1x8x16xf32>
    %4 = vector.shape_cast %3 : vector<1x1x8x16xf32> to vector<8x16xf32>
    %5 = arith.addf %2, %4 : vector<8x16xf32>
    %cst = arith.constant dense<0.000000e+00> : vector<8x8xf32>
    %6 = tpu.matmul %5, %0, %cst {dimension_numbers = #tpu.dot_dimension_numbers<[1], [0], [0], [1], [0, 0, 1, 1], [], []>} : vector<8x16xf32>, vector<16x8xf32>, vector<8x8xf32> -> vector<8x8xf32>
    %c0_8 = arith.constant 0 : index
    %c0_9 = arith.constant 0 : index
    %c0_10 = arith.constant 0 : index
    %c0_11 = arith.constant 0 : index
    %7 = vector.load %arg5[%c0_8, %c0_9, %c0_10, %c0_11] : memref<1x1x8x8xf32, #tpu.memory_space<vmem>>, vector<1x1x8x8xf32>
    %8 = vector.shape_cast %7 : vector<1x1x8x8xf32> to vector<8x8xf32>
    %9 = vector.shape_cast %6 : vector<8x8xf32> to vector<1x1x8x8xf32>
    tpu.vector_store %arg5[%c0_8, %c0_9, %c0_10, %c0_11], %9 {strides = array<i32>} : memref<1x1x8x8xf32, #tpu.memory_space<vmem>>, vector<1x1x8x8xf32>,
    return
  }
  func.func @transform_0(%arg0: i32, %arg1: i32, %arg2: i32) -> (i32, i32, i32, i32) {
    %c0_i32 = arith.constant 0 : i32
    %c0_i32_0 = arith.constant 0 : i32
    return %arg0, %arg1, %arg2, %c0_i32 : i32, i32, i32, i32
  }
  func.func @transform_1(%arg0: i32, %arg1: i32, %arg2: i32) -> (i32, i32) {
    %c0_i32 = arith.constant 0 : i32
    %c0_i32_0 = arith.constant 0 : i32
    %c0_i32_1 = arith.constant 0 : i32
    return %c0_i32, %c0_i32_0 : i32, i32
  }
  func.func @transform_2(%arg0: i32, %arg1: i32, %arg2: i32) -> (i32, i32, i32, i32) {
    %c0_i32 = arith.constant 0 : i32
    %c0_i32_0 = arith.constant 0 : i32
    return %arg0, %arg1, %arg2, %c0_i32 : i32, i32, i32, i32
  }
}

</mosaic_0001>

<llo_original>
// kernel: _pyramid_call.1
$region0: #{_pyramid_call.1}
  #allocation0 [shape = 'u32[]', space=smem, size = 0x4, offset = 0x4, fixed_abs, tag = 'smem constant byte address 0x4 - core index']
  #allocation1 [shape = 'u32[72,128]{1,0:T(1,128)}', space=vmem, size = 0x9000, scoped, tag = 'internal scratch']
  %s0 = inlined_call_operand.hbm [shape: f32[2,4,16,16], index: 0, kind: input, shape index: {}]
  %s1 = inlined_call_operand.vmem [shape: f32[16,8], index: 1, kind: input, shape index: {}]
  %s2 = inlined_call_operand.hbm [shape: f32[2,4,8,8], index: 2, kind: output, shape index: {}]
  %s3 = sld [smem:[#allocation0]]
  $region45: #{_pyramid_call.1} parent=0
    _
  %s5 = ssub.s32 1, %s3
  %s6 = scalar_select 0, %s5, %s3
  $region1: #{_pyramid_call.1} parent=0
    #allocation2 [shape = 'u8[16384]{0}', space=vmem, size = 0x4000, scoped, tag = 'input window, operand 0']
    #allocation3 [shape = 's32[2]{0}', space=sflag, size = 0x8, scoped, tag = 'scoped memory for _pyramid_call.1']
    #allocation4 [shape = 's32[2]{0}', space=sflag, size = 0x8, scoped, tag = 'scoped memory for _pyramid_call.1']
    #allocation5 [shape = 'u8[8192]{0}', space=vmem, size = 0x2000, scoped, tag = 'output window, operand 0']
    %7 = vsyncpa [#allocation3], 0
    %s8 = scalar_lea.sflag [#allocation3], 1
    %9 = vsyncpa %s8, 0
    %10 = vsyncpa [#allocation4], 0
    %s11 = scalar_lea.sflag [#allocation4], 1
    %12 = vsyncpa %s11, 0
    loop: start=0, step=1, limit=10
    $region2: #{_pyramid_call.1} parent=1 // loop_pre_header
      _
    $region3: #{_pyramid_call.1} parent=1 // loop_header
      %s14 = sphi 0, %s18
      %p15 = scmp.ge.s32.totalorder %s14, 10
      %s21 = sphi 0, %s40
      %s22 = sphi 0, %s36
      %s23 = sphi 0, %s32
      %s24 = sphi 0, %s21
      %s25 = sphi 0, %s22
      %s26 = sphi 0, %s23
      %s27 = sphi 0, %s24
      %s28 = sphi 0, %s25
      %s29 = sphi 0, %s26
      %s47 = sphi 0, %s49
      %s50 = sphi 0, %s47
      %s51 = sphi 0, %s50
      %s67 = sphi 0, %s51
      %s71 = sphi 0, %s71
      %s73 = sphi 0, %s71
      %s74 = sphi 0, %s73
      %s88 = sphi 0, %s74
      %s98 = sphi 0, %s100
      %s101 = sphi 0, %s98
      %s102 = sphi 0, %s101
      %s118 = sphi 0, %s102
    $region4: #{_pyramid_call.1} parent=1 // loop_header_branch
      %17 = sbr.rel (%p15) target = $region8
    $region5: #{_pyramid_call.1} parent=1 // loop_body
      %s19 = ssub.s32 %s14, 1
      %s20 = ssub.s32 %s14, 2
      %s30 = sadd.s32 1, %s23
      %p31 = scmp.ge.s32.totalorder %s30, 1
      %s32 = scalar_select %p31, 0, %s30
      %s33 = sadd.s32 1, %s22
      %s34 = scalar_select %p31, %s33, %s22
      %p35 = scmp.ge.s32.totalorder %s34, 4
      %s36 = scalar_select %p35, 0, %s34
      %s37 = sadd.s32 1, %s21
      %s38 = scalar_select %p35, %s37, %s21
      %p39 = scmp.ge.s32.totalorder %s38, 2
      %s40 = scalar_select %p39, 0, %s38
      %s41 = ssub.s32 %s21, %s40
      %s42 = ssub.s32 %s22, %s36
      %s43 = sor.u32 %s41, %s42
      %s44 = ssub.s32 %s23, %s32
      %s45 = sor.u32 %s43, %s44
      %p46 = scmp.eq.s32.totalorder %s45, 0
      %s48 = sadd.s32 %s47, 1
      %s49 = scalar_select %p46, %s47, %s48
      %p52 = pneg %p46
      %p53 = scmp.eq.s32.totalorder %s14, 7
      %p54 = por %p52, %p53
      %p55 = scmp.ne.s32.totalorder %s47, %s50
      %p56 = scmp.eq.s32.totalorder %s14, 0
      %p57 = por %p55, %p56
      %p58 = scmp.ne.s32.totalorder %s47, %s50
      %p59 = scmp.eq.s32.totalorder %s19, 7
      %p60 = por %p58, %p59
      %p61 = scmp.ne.s32.totalorder %s50, %s51
      %p62 = scmp.eq.s32.totalorder %s19, 0
      %p63 = por %p61, %p62
      %p64 = scmp.ne.s32.totalorder %s50, %s51
      %p65 = scmp.eq.s32.totalorder %s20, 7
      %p66 = por %p64, %p65
      %p68 = scmp.ne.s32.totalorder %s51, %s67
      %p69 = scmp.eq.s32.totalorder %s20, 0
      %p70 = por %p68, %p69
      %s72 = sadd.s32 %s71, 1
      %p75 = scmp.eq.s32.totalorder %s14, 7
      %p76 = scmp.ne.s32.totalorder %s71, %s73
      %p77 = scmp.eq.s32.totalorder %s14, 0
      %p78 = por %p76, %p77
      %p79 = scmp.ne.s32.totalorder %s71, %s73
      %p80 = scmp.eq.s32.totalorder %s19, 7
      %p81 = por %p79, %p80
      %p82 = scmp.ne.s32.totalorder %s73, %s74
      %p83 = scmp.eq.s32.totalorder %s19, 0
      %p84 = por %p82, %p83
      %p85 = scmp.ne.s32.totalorder %s73, %s74
      %p86 = scmp.eq.s32.totalorder %s20, 7
      %p87 = por %p85, %p86
      %p89 = scmp.ne.s32.totalorder %s74, %s88
      %p90 = scmp.eq.s32.totalorder %s20, 0
      %p91 = por %p89, %p90
      %s92 = ssub.s32 %s21, %s40
      %s93 = ssub.s32 %s22, %s36
      %s94 = sor.u32 %s92, %s93
      %s95 = ssub.s32 %s23, %s32
      %s96 = sor.u32 %s94, %s95
      %p97 = scmp.eq.s32.totalorder %s96, 0
      %s99 = sadd.s32 %s98, 1
      %s100 = scalar_select %p97, %s98, %s99
      %p103 = pneg %p97
      %p104 = scmp.eq.s32.totalorder %s14, 7
      %p105 = por %p103, %p104
      %p106 = scmp.ne.s32.totalorder %s98, %s101
      %p107 = scmp.eq.s32.totalorder %s14, 0
      %p108 = por %p106, %p107
      %p109 = scmp.ne.s32.totalorder %s98, %s101
      %p110 = scmp.eq.s32.totalorder %s19, 7
      %p111 = por %p109, %p110
      %p112 = scmp.ne.s32.totalorder %s101, %s102
      %p113 = scmp.eq.s32.totalorder %s19, 0
      %p114 = por %p112, %p113
      %p115 = scmp.ne.s32.totalorder %s101, %s102
      %p116 = scmp.eq.s32.totalorder %s20, 7
      %p117 = por %p115, %p116
      %p119 = scmp.ne.s32.totalorder %s102, %s118
      %p120 = scmp.eq.s32.totalorder %s20, 0
      %p121 = por %p119, %p120
      %p122 = scmp.le.s32.totalorder 1, %s14
      %p123 = scmp.lt.s32.totalorder %s14, 9
      %p124 = pnand %p122, %p123
      %p125 = pneg %p124
      // Predicated region
      $region9: #{_pyramid_call.1} parent=5 // pred_check
        _
      $region10: #{_pyramid_call.1} parent=5 // pred_check_branch
        %127 = sbr.rel (%p124) target = $region12
      $region11: #{_pyramid_call.1} parent=5 // pred_region
        %s128 = ssub.s32 %s14, 1
        // Predicated region
        $region13: #{_pyramid_call.1} parent=11 // pred_check
          %p129 = pneg %p84
        $region14: #{_pyramid_call.1} parent=11 // pred_check_branch
          %131 = sbr.rel (%p129) target = $region16
        $region15: #{_pyramid_call.1} parent=11 // pred_region
          _
        $region16: #{_pyramid_call.1} parent=11 // pred_fallthru
          _
      $region12: #{_pyramid_call.1} parent=5 // pred_fallthru
        _
      %p132 = scmp.lt.s32.totalorder %s14, 8
      // Predicated region
      $region17: #{_pyramid_call.1} parent=5 // pred_check
        %p133 = pneg %p132
      $region18: #{_pyramid_call.1} parent=5 // pred_check_branch
        %135 = sbr.rel (%p133) target = $region20
      $region19: #{_pyramid_call.1} parent=5 // pred_region
        // Predicated region
        $region21: #{_pyramid_call.1} parent=19 // pred_check
          %p136 = pneg %p57
        $region22: #{_pyramid_call.1} parent=19 // pred_check_branch
          %138 = sbr.rel (%p136) target = $region24
        $region23: #{_pyramid_call.1} parent=19 // pred_region
          %s139 = sand.u32 %s47, 1
          %s140 = scalar_lea.sflag [#allocation3], %s139
          %s141 = sand.u32 %s47, 1
          %s142 = smul.addr %s141, 16
          %s143 = scalar_lea.vmem [#allocation2], %s142
          %s144 = smul.u32 2, %s23
          %146 = vsyncadd %s140, 0
          %s147 = smul.addr %s22, 2
          %s148 = sadd.s32 %s144, %s147
          %s149 = smul.addr %s21, 8
          %s150 = sadd.s32 %s148, %s149
          %s151 = smul.addr %s150, 8
          %s152 = scalar_lea.hbm %s0, %s151
          %s153 = sshll.u32 %s152, 4
          %s154 = int_to_ptr.hbm [resolvable:$true] %s153
          %s155 = sshll.u32 %s143, 4
          %s156 = int_to_ptr.vmem [resolvable:$true] %s155
          %161 = dma.hbm_to_vmem [thread:$0]  %s154, 256, %s156, %s140, 128, 128, 8
        $region24: #{_pyramid_call.1} parent=19 // pred_fallthru
          _
      $region20: #{_pyramid_call.1} parent=5 // pred_fallthru
        _
      %p162 = scmp.le.s32.totalorder 1, %s14
      %p163 = scmp.lt.s32.totalorder %s14, 9
      %p164 = pnand %p162, %p163
      %p165 = pneg %p164
      // Predicated region
      $region25: #{_pyramid_call.1} parent=5 // pred_check
        _
      $region26: #{_pyramid_call.1} parent=5 // pred_check_branch
        %167 = sbr.rel (%p164) target = $region28
      $region27: #{_pyramid_call.1} parent=5 // pred_region
        %s168 = ssub.s32 %s14, 1
        %s169 = sand.u32 %s50, 1
        %s170 = scalar_lea.sflag [#allocation3], %s169
        %s171 = sand.u32 %s50, 1
        %s172 = smul.addr %s171, 16
        %s173 = scalar_lea.vmem [#allocation2], %s172
        // Predicated region
        $region29: #{_pyramid_call.1} parent=27 // pred_check
          %p174 = pneg %p63
        $region30: #{_pyramid_call.1} parent=27 // pred_check_branch
          %176 = sbr.rel (%p174) target = $region32
        $region31: #{_pyramid_call.1} parent=27 // pred_region
          %178 = dma.done %s170, 256
        $region32: #{_pyramid_call.1} parent=27 // pred_fallthru
          _
        %s179 = sand.u32 %s50, 1
        %s180 = scalar_lea.sflag [#allocation3], %s179
        %s181 = sand.u32 %s50, 1
        %s182 = smul.addr %s181, 16
        %s183 = scalar_lea.vmem [#allocation2], %s182
        %p184 = pneg %p63
        %p185 = pneg %p60
        %p186 = pneg %p84
        %p187 = pneg %p81
        %p188 = pneg %p114
        %p189 = pneg %p111
        %s190 = sand.u32 %s101, 1
        %s191 = scalar_lea.sflag [#allocation4], %s190
        %s192 = sand.u32 %s101, 1
        %s193 = smul.addr %s192, 8
        %s194 = scalar_lea.vmem [#allocation5], %s193
        %s195 = smul.u32 2, %s26
        %v196 = vld [vmem:[%s1] sm:$0xff]
        %v197 = vld [vmem:[%s1 + $0x8] sm:$0xff]
        %v198 = vld [vmem:[%s173] ss:$2 sm:$0xff]
        %s199 = scalar_lea.vmem %s173, 1 [#allocation2]
        %v200 = vld [vmem:[%s199] ss:$2 sm:$0xff]
        %v201 = vadd.f32 %v198, %v200
        %vm202 = vcmask 130048
        %v204 = vsel %vm202, %v201, 0
        %206 = vmatpush.msra.mxu0 0.0
        %207 = vmatpush.msra.mxu0 0.0
        %208 = vmatpush.msra.mxu0 0.0
        %209 = vmatpush.msra.mxu0 0.0
        %210 = vmatpush.msra.mxu0 0.0
        %211 = vmatpush.msra.mxu0 0.0
        %212 = vmatpush.msra.mxu0 0.0
        %213 = vmatpush.msra.mxu0 0.0
        %214 = vmatpush.msra.mxu0 0.0
        %215 = vmatpush.msra.mxu0 0.0
        %216 = vmatpush.msra.mxu0 0.0
        %217 = vmatpush.msra.mxu0 0.0
        %218 = vmatpush.msra.mxu0 0.0
        %219 = vmatpush.msra.mxu0 0.0
        %220 = vmatpush.msra.mxu0 %v197
        %221 = vmatpush.msra.mxu0 %v196
        %222 = vmatmul.f32.gmra.mxu0 %v204
        %v223 = vpop.f32.mrf.mxu0
        %v224 = vadd.f32 0.0, %v223
        %225 = vdwg.mxu0
        %vm226 = vcmask 64512
        %227 = vst.msk [vmem:[%s194] sm:$0xff] %vm226, %v224
        %s228 = sand.u32 %s101, 1
        %s229 = scalar_lea.sflag [#allocation4], %s228
        %s230 = sand.u32 %s101, 1
        %s231 = smul.addr %s230, 8
        %s232 = scalar_lea.vmem [#allocation5], %s231
        // Predicated region
        $region33: #{_pyramid_call.1} parent=27 // pred_check
          %p233 = pneg %p111
        $region34: #{_pyramid_call.1} parent=27 // pred_check_branch
          %235 = sbr.rel (%p233) target = $region36
        $region35: #{_pyramid_call.1} parent=27 // pred_region
          %237 = vsyncadd %s229, 0
          %s238 = sadd.s32 %s26, %s25
          %s239 = smul.addr %s24, 4
          %s240 = sadd.s32 %s238, %s239
          %s241 = smul.addr %s240, 8
          %s242 = scalar_lea.hbm %s2, %s241
          %s244 = sshll.u32 %s232, 4
          %s245 = int_to_ptr.vmem [resolvable:$true] %s244
          %s246 = sshll.u32 %s242, 4
          %s247 = int_to_ptr.hbm [resolvable:$true] %s246
          %249 = dma.vmem_to_hbm [thread:$0]  %s245, 128, %s247, %s229
        $region36: #{_pyramid_call.1} parent=27 // pred_fallthru
          _
      $region28: #{_pyramid_call.1} parent=5 // pred_fallthru
        _
      %p250 = scmp.le.s32.totalorder 2, %s14
      // Predicated region
      $region37: #{_pyramid_call.1} parent=5 // pred_check
        %p251 = pneg %p250
      $region38: #{_pyramid_call.1} parent=5 // pred_check_branch
        %253 = sbr.rel (%p251) target = $region40
      $region39: #{_pyramid_call.1} parent=5 // pred_region
        %s254 = ssub.s32 %s14, 2
        // Predicated region
        $region41: #{_pyramid_call.1} parent=39 // pred_check
          %p255 = pneg %p117
        $region42: #{_pyramid_call.1} parent=39 // pred_check_branch
          %257 = sbr.rel (%p255) target = $region44
        $region43: #{_pyramid_call.1} parent=39 // pred_region
          %s258 = sand.u32 %s102, 1
          %s259 = scalar_lea.sflag [#allocation4], %s258
          %s260 = sand.u32 %s102, 1
          %s261 = smul.addr %s260, 8
          %s262 = scalar_lea.vmem [#allocation5], %s261
          %264 = dma.done %s259, 128
        $region44: #{_pyramid_call.1} parent=39 // pred_fallthru
          _
      $region40: #{_pyramid_call.1} parent=5 // pred_fallthru
        _
    $region6: #{_pyramid_call.1} parent=1 // loop_footer
      %s18 = sadd.s32 1, %s14
    $region7: #{_pyramid_call.1} parent=1 // loop_footer_branch
      %13 = sbr.rel target = $region3
    $region8: #{_pyramid_call.1} parent=1 // loop_exit
      _
    %265 = vsyncpa [#allocation3], 1
    %s266 = scalar_lea.sflag [#allocation3], 1
    %267 = vsyncpa %s266, 1
    %268 = vsyncpa [#allocation4], 1
    %s269 = scalar_lea.sflag [#allocation4], 1
    %270 = vsyncpa %s269, 1

</llo_original>
